<compile_context>
chip_gen: v6e
topology: v6e:2x2x1
jax: 0.10.0
libtpu: 0.0.40
codegen_flags: <defaults>
</compile_context>

<pallas_src>
import math

import jax
import jax.numpy as jnp
from jax.experimental import pallas as pl
from jax.experimental.pallas import tpu as pltpu


# ---------------------------------------------------------------------------
# Kernel
# ---------------------------------------------------------------------------

def _row_max(v):
    # Per-row (per-sample) max over the (S, 128) tile, keepdims -> (B, 1, 1).
    return jnp.max(jnp.max(v, axis=2, keepdims=True), axis=1, keepdims=True)


def _row_min(v):
    return jnp.min(jnp.min(v, axis=2, keepdims=True), axis=1, keepdims=True)


def _nonuniform_bg_kernel(x_ref, p_ref, xg_ref, yg_ref, mask_ref, o_ref):
    # x_ref : (B, S, 128) flattened, padded input rows (one row = one sample)
    # p_ref : (B, 1, 128) per-sample params [a, b, c, x0, y0, bmin, bscale, 0...]
    # xg/yg : (1, S, 128) flattened coordinate grids (grid-constant blocks)
    # mask  : (1, S, 128) 1.0 on real elements, 0.0 on the 128-pad tail
    x = x_ref[...]
    p = p_ref[...]
    xg = xg_ref[...]
    yg = yg_ref[...]
    valid = mask_ref[...] != 0.0

    a = p[:, :, 0:1]          # (B, 1, 1)
    b = p[:, :, 1:2]
    c = p[:, :, 2:3]
    x0 = p[:, :, 3:4]
    y0 = p[:, :, 4:5]
    bmin = p[:, :, 5:6]
    bscale = p[:, :, 6:7]     # = bmax_i - bmin_i (0 for inactive rows)

    dx = xg - x0              # broadcast -> (B, S, 128)
    dy = yg - y0
    q = a * (dx * dx) + (2.0 * b) * (dx * dy) + c * (dy * dy)
    h = jnp.exp(-(q * q))

    # Per-sample max (pad lanes excluded), threshold, per-sample min.
    maxh = _row_max(jnp.where(valid, h, jnp.float32(-jnp.inf)))
    h = jnp.where(h < 1e-6 * maxh, 0.0, h)
    minh = _row_min(jnp.where(valid, h, jnp.float32(jnp.inf)))

    # One exact reciprocal per sample row instead of a per-element divide.
    inv = pl.reciprocal(maxh - minh, approx=False)
    bg = (h - minh) * (inv * bscale) + bmin
    o_ref[...] = x + bg


# ---------------------------------------------------------------------------
# Wrapper
# ---------------------------------------------------------------------------

def _choose_block_rows(n_rows, bytes_per_row, target_bytes=1 << 20):
    """Largest divisor of n_rows with block <= ~target_bytes, keeping >= 2 grid steps."""
    cap = max(1, target_bytes // max(bytes_per_row, 1))
    if n_rows >= 2:
        cap = min(cap, max(1, n_rows // 2))  # keep a parallel axis of extent >= 2
    best = 1
    for d in range(1, n_rows + 1):
        if n_rows % d == 0 and d <= cap:
            best = d
    return best


def draw_bg_params(key, batch_size_gen, H, W, offset_xy, theta_range, b_minvals):
    """JAX equivalent of the torch.rand() parameter draws in NonUniformBg.forward."""
    offx, offy = offset_xy
    tmin, tmax = theta_range
    bmin0, bmax0 = b_minvals
    G = batch_size_gen
    ks = jax.random.split(key, 7)
    u = lambda k: jax.random.uniform(k, (G,), dtype=jnp.float32)

    x0 = -offx + u(ks[0]) * offx * 2.0
    y0 = -offy + u(ks[1]) * offy * 2.0
    sigx = W / 5.0 + u(ks[2]) * W / 5.0
    sigy = H / 5.0 + u(ks[3]) * H / 5.0
    theta = tmin + u(ks[4]) * (tmax - tmin)
    bmin = bmin0 + u(ks[5]) * bmin0 / 2.0
    bmax = bmax0 + u(ks[6]) * bmax0 / 2.0

    a = jnp.cos(theta) ** 2 / (2.0 * sigx ** 2) + jnp.sin(theta) ** 2 / (2.0 * sigy ** 2)
    b = -jnp.sin(2.0 * theta) / (4.0 * sigx ** 2) + jnp.sin(2.0 * theta) / (4.0 * sigy ** 2)
    c = jnp.sin(theta) ** 2 / (2.0 * sigx ** 2) + jnp.cos(theta) ** 2 / (2.0 * sigy ** 2)

    return {"a": a, "b": b, "c": c, "x0": x0, "y0": y0,
            "bmin": bmin, "bscale": bmax - bmin}


def _pack_params(params, N, G):
    """(N, 1, 128) f32 param table; rows >= G get safe values that yield bg == 0."""
    def fill(default, name):
        base = jnp.full((N,), default, dtype=jnp.float32)
        return base.at[:G].set(params[name].astype(jnp.float32))

    cols = jnp.stack(
        [fill(1.0, "a"), fill(0.0, "b"), fill(1.0, "c"),
         fill(0.0, "x0"), fill(0.0, "y0"),
         fill(0.0, "bmin"), fill(0.0, "bscale")],
        axis=1)                                              # (N, 7)
    p = jnp.zeros((N, 128), jnp.float32).at[:, :7].set(cols)
    return p.reshape(N, 1, 128)


def nonuniform_bg(x, bg_params, *, batch_size_gen=None):
    """out = x + random non-uniform background (per sample). x: (N, C, H, W)."""
    N, C, H, W = x.shape
    G = N if batch_size_gen is None else batch_size_gen

    L = C * H * W
    Lp = ((L + 127) // 128) * 128          # lane-dense: pad to multiple of 128
    Sp = Lp // 128

    # Flattened coordinate grids (tiled over channels) + validity mask.
    ybase = jnp.arange(H, dtype=jnp.float32) - (H - 1) / 2.0
    xbase = jnp.arange(W, dtype=jnp.float32) - (W - 1) / 2.0
    Xg = jnp.tile(jnp.broadcast_to(xbase[None, :], (H, W)).reshape(-1), (C,))
    Yg = jnp.tile(jnp.broadcast_to(ybase[:, None], (H, W)).reshape(-1), (C,))
    mask = jnp.ones((L,), jnp.float32)

    pad1 = lambda v: jnp.pad(v, (0, Lp - L)).reshape(1, Sp, 128)
    xg3, yg3, m3 = pad1(Xg), pad1(Yg), pad1(mask)

    x3 = jnp.pad(x.astype(jnp.float32).reshape(N, L), ((0, 0), (0, Lp - L)))
    x3 = x3.reshape(N, Sp, 128)
    p3 = _pack_params(bg_params, N, G)

    row_bytes = Lp * 4
    B_blk = _choose_block_rows(N, row_bytes)
    grid0 = N // B_blk

    # Explicit (raised) VMEM limit with headroom; cap safely below v7x's 64 MiB.
    blk_bytes = B_blk * row_bytes
    const_bytes = 3 * Sp * 128 * 4 + B_blk * 128 * 4
    vmem_needed = 4 * blk_bytes + 2 * const_bytes + (4 << 20)
    vmem_limit = int(min(48 * 1024 * 1024, max(vmem_needed, 32 * 1024 * 1024)))

    out3 = pl.pallas_call(
        _nonuniform_bg_kernel,
        out_shape=jax.ShapeDtypeStruct((N, Sp, 128), jnp.float32),
        grid_spec=pltpu.PrefetchScalarGridSpec(
            num_scalar_prefetch=0,
            grid=(grid0,),
            in_specs=[
                pl.BlockSpec((B_blk, Sp, 128), lambda i: (i, 0, 0)),   # x rows
                pl.BlockSpec((B_blk, 1, 128), lambda i: (i, 0, 0)),    # params
                pl.BlockSpec((1, Sp, 128), lambda i: (0, 0, 0)),       # X grid
                pl.BlockSpec((1, Sp, 128), lambda i: (0, 0, 0)),       # Y grid
                pl.BlockSpec((1, Sp, 128), lambda i: (0, 0, 0)),       # mask
            ],
            out_specs=pl.BlockSpec((B_blk, Sp, 128), lambda i: (i, 0, 0)),
        ),
        compiler_params=pltpu.CompilerParams(
            dimension_semantics=("parallel",),
            vmem_limit_bytes=vmem_limit,
        ),
        input_output_aliases={0: 0},
    )(x3, p3, xg3, yg3, m3)

    out = out3.reshape(N, Lp)[:, :L].reshape(N, C, H, W)
    return out.astype(x.dtype)


# ---------------------------------------------------------------------------
# Pure-JAX reference reproducing the PyTorch loop semantics.
# ---------------------------------------------------------------------------

def _reference_nonuniform_bg(x, params, *, batch_size_gen=None):
    N, C, H, W = x.shape
    G = N if batch_size_gen is None else batch_size_gen
    yv = (jnp.arange(H, dtype=jnp.float32) - (H - 1) / 2.0)[None, :, None]
    xv = (jnp.arange(W, dtype=jnp.float32) - (W - 1) / 2.0)[None, None, :]

    a = params["a"][:, None, None]
    b = params["b"][:, None, None]
    c = params["c"][:, None, None]
    x0 = params["x0"][:, None, None]
    y0 = params["y0"][:, None, None]
    bmin = params["bmin"][:, None, None]
    bscale = params["bscale"][:, None, None]

    dx = xv - x0
    dy = yv - y0
    q = a * (dx * dx) + (2.0 * b) * (dx * dy) + c * (dy * dy)
    h = jnp.exp(-(q * q))
    maxh = jnp.max(h, axis=(1, 2), keepdims=True)
    h = jnp.where(h < 1e-6 * maxh, 0.0, h)
    minh = jnp.min(h, axis=(1, 2), keepdims=True)
    bg = (h - minh) / (maxh - minh) * bscale + bmin        # (G, H, W)

    bgs = jnp.zeros((N, 1, H, W), jnp.float32).at[:G, 0].set(bg)
    return (x.astype(jnp.float32) + bgs).astype(x.dtype)


# ---------------------------------------------------------------------------

if __name__ == "__main__":
    key = jax.random.PRNGKey(0)
    k_in, k_bg = jax.random.split(key)

    N, C, H, W = 2, 1, 16, 16
    x = jax.random.normal(k_in, (N, C, H, W), dtype=jnp.float32) * 3.0 + 5.0

    offset_xy = (2.0, 2.0)                       # nonunif_bg_offset
    theta_range = (-0.25 * math.pi, 0.25 * math.pi)  # nonunif_bg_theta_range
    b_minvals = (20.0, 100.0)                    # nonunif_bg_minvals

    params = draw_bg_params(k_bg, N, H, W, offset_xy, theta_range, b_minvals)

    out = nonuniform_bg(x, params, batch_size_gen=N)
    out = jax.block_until_ready(out)

    ref = _reference_nonuniform_bg(x, params, batch_size_gen=N)
    assert out.shape == x.shape and out.dtype == x.dtype
    max_err = float(jnp.max(jnp.abs(out - ref)))
    assert jnp.allclose(out, ref, atol=1e-3, rtol=1e-4), max_err

    print("KERNEL_OK")
</pallas_src>

<mosaic_0001>
module attributes {stable_mosaic.version = 11 : i64} {
  func.func @_nonuniform_bg_kernel(%arg0: i32, %arg1: memref<1x2x128xf32, #tpu.memory_space<vmem>>, %arg2: memref<1x1x128xf32, #tpu.memory_space<vmem>>, %arg3: memref<1x2x128xf32, #tpu.memory_space<vmem>>, %arg4: memref<1x2x128xf32, #tpu.memory_space<vmem>>, %arg5: memref<1x2x128xf32, #tpu.memory_space<vmem>>, %arg6: memref<1x2x128xf32, #tpu.memory_space<vmem>>) attributes {dimension_semantics = [#tpu.dimension_semantics<parallel>], iteration_bounds = array<i64: 2>, scalar_prefetch = 0 : i64, scratch_operands = 0 : i64, tpu.core_type = #tpu.core_type<tc>, window_params = [{transform_indices = @transform_0, window_bounds = array<i64: 1, 2, 128>}, {transform_indices = @transform_1, window_bounds = array<i64: 1, 1, 128>}, {pipeline_mode = #tpu.pipeline_mode<synchronous>, transform_indices = @transform_2, window_bounds = array<i64: 1, 2, 128>}, {pipeline_mode = #tpu.pipeline_mode<synchronous>, transform_indices = @transform_3, window_bounds = array<i64: 1, 2, 128>}, {pipeline_mode = #tpu.pipeline_mode<synchronous>, transform_indices = @transform_4, window_bounds = array<i64: 1, 2, 128>}, {transform_indices = @transform_5, window_bounds = array<i64: 1, 2, 128>}]} {
    %c0 = arith.constant 0 : index
    %c0_0 = arith.constant 0 : index
    %c0_1 = arith.constant 0 : index
    %0 = vector.load %arg1[%c0, %c0_0, %c0_1] : memref<1x2x128xf32, #tpu.memory_space<vmem>>, vector<1x2x128xf32>
    %c0_2 = arith.constant 0 : index
    %c0_3 = arith.constant 0 : index
    %c0_4 = arith.constant 0 : index
    %1 = vector.load %arg2[%c0_2, %c0_3, %c0_4] : memref<1x1x128xf32, #tpu.memory_space<vmem>>, vector<1x1x128xf32>
    %c0_5 = arith.constant 0 : index
    %c0_6 = arith.constant 0 : index
    %c0_7 = arith.constant 0 : index
    %2 = vector.load %arg3[%c0_5, %c0_6, %c0_7] : memref<1x2x128xf32, #tpu.memory_space<vmem>>, vector<1x2x128xf32>
    %c0_8 = arith.constant 0 : index
    %c0_9 = arith.constant 0 : index
    %c0_10 = arith.constant 0 : index
    %3 = vector.load %arg4[%c0_8, %c0_9, %c0_10] : memref<1x2x128xf32, #tpu.memory_space<vmem>>, vector<1x2x128xf32>
    %c0_11 = arith.constant 0 : index
    %c0_12 = arith.constant 0 : index
    %c0_13 = arith.constant 0 : index
    %4 = vector.load %arg5[%c0_11, %c0_12, %c0_13] : memref<1x2x128xf32, #tpu.memory_space<vmem>>, vector<1x2x128xf32>
    %cst = arith.constant 0.000000e+00 : f32
    %5 = vector.broadcast %cst : f32 to vector<1x2x128xf32>
    %6 = arith.cmpf one, %4, %5 : vector<1x2x128xf32>
    %7 = vector.extract_strided_slice %1 {offsets = [0, 0, 0], sizes = [1, 1, 1], strides = [1, 1, 1]} : vector<1x1x128xf32> to vector<1x1x1xf32>
    %8 = vector.extract_strided_slice %1 {offsets = [0, 0, 1], sizes = [1, 1, 1], strides = [1, 1, 1]} : vector<1x1x128xf32> to vector<1x1x1xf32>
    %9 = vector.extract_strided_slice %1 {offsets = [0, 0, 2], sizes = [1, 1, 1], strides = [1, 1, 1]} : vector<1x1x128xf32> to vector<1x1x1xf32>
    %10 = vector.extract_strided_slice %1 {offsets = [0, 0, 3], sizes = [1, 1, 1], strides = [1, 1, 1]} : vector<1x1x128xf32> to vector<1x1x1xf32>
    %11 = vector.extract_strided_slice %1 {offsets = [0, 0, 4], sizes = [1, 1, 1], strides = [1, 1, 1]} : vector<1x1x128xf32> to vector<1x1x1xf32>
    %12 = vector.extract_strided_slice %1 {offsets = [0, 0, 5], sizes = [1, 1, 1], strides = [1, 1, 1]} : vector<1x1x128xf32> to vector<1x1x1xf32>
    %13 = vector.extract_strided_slice %1 {offsets = [0, 0, 6], sizes = [1, 1, 1], strides = [1, 1, 1]} : vector<1x1x128xf32> to vector<1x1x1xf32>
    %14 = vector.broadcast %10 : vector<1x1x1xf32> to vector<1x2x128xf32>
    %15 = arith.subf %2, %14 : vector<1x2x128xf32>
    %16 = vector.broadcast %11 : vector<1x1x1xf32> to vector<1x2x128xf32>
    %17 = arith.subf %3, %16 : vector<1x2x128xf32>
    %18 = arith.mulf %15, %15 : vector<1x2x128xf32>
    %19 = vector.broadcast %7 : vector<1x1x1xf32> to vector<1x2x128xf32>
    %20 = arith.mulf %19, %18 : vector<1x2x128xf32>
    %cst_14 = arith.constant 2.000000e+00 : f32
    %21 = vector.broadcast %cst_14 : f32 to vector<1x1x1xf32>
    %22 = arith.mulf %21, %8 : vector<1x1x1xf32>
    %23 = arith.mulf %15, %17 : vector<1x2x128xf32>
    %24 = vector.broadcast %22 : vector<1x1x1xf32> to vector<1x2x128xf32>
    %25 = arith.mulf %24, %23 : vector<1x2x128xf32>
    %26 = arith.addf %20, %25 : vector<1x2x128xf32>
    %27 = arith.mulf %17, %17 : vector<1x2x128xf32>
    %28 = vector.broadcast %9 : vector<1x1x1xf32> to vector<1x2x128xf32>
    %29 = arith.mulf %28, %27 : vector<1x2x128xf32>
    %30 = arith.addf %26, %29 : vector<1x2x128xf32>
    %31 = arith.mulf %30, %30 : vector<1x2x128xf32>
    %cst_15 = arith.constant 0.000000e+00 : f32
    %32 = vector.broadcast %cst_15 : f32 to vector<1x2x128xf32>
    %33 = arith.subf %32, %31 : vector<1x2x128xf32>
    %34 = math.exp %33 : vector<1x2x128xf32>
    %cst_16 = arith.constant 0xFF800000 : f32
    %35 = vector.broadcast %cst_16 : f32 to vector<1x2x128xf32>
    %36 = arith.select %6, %34, %35 : vector<1x2x128xi1>, vector<1x2x128xf32>
    %cst_17 = arith.constant dense<0xFF800000> : vector<1x2xf32>
    %37 = vector.multi_reduction <maximumf>, %36, %cst_17 [2] : vector<1x2x128xf32> to vector<1x2xf32>
    %38 = vector.shape_cast %37 : vector<1x2xf32> to vector<1x2x1xf32>
    %cst_18 = arith.constant dense<0xFF800000> : vector<1x1xf32>
    %39 = vector.multi_reduction <maximumf>, %38, %cst_18 [1] : vector<1x2x1xf32> to vector<1x1xf32>
    %40 = vector.shape_cast %39 : vector<1x1xf32> to vector<1x1x1xf32>
    %cst_19 = arith.constant 9.99999997E-7 : f32
    %41 = vector.broadcast %cst_19 : f32 to vector<1x1x1xf32>
    %42 = arith.mulf %41, %40 : vector<1x1x1xf32>
    %43 = vector.broadcast %42 : vector<1x1x1xf32> to vector<1x2x128xf32>
    %44 = arith.cmpf olt, %34, %43 : vector<1x2x128xf32>
    %cst_20 = arith.constant 0.000000e+00 : f32
    %45 = vector.broadcast %cst_20 : f32 to vector<1x2x128xf32>
    %46 = arith.select %44, %45, %34 : vector<1x2x128xi1>, vector<1x2x128xf32>
    %cst_21 = arith.constant 0x7F800000 : f32
    %47 = vector.broadcast %cst_21 : f32 to vector<1x2x128xf32>
    %48 = arith.select %6, %46, %47 : vector<1x2x128xi1>, vector<1x2x128xf32>
    %cst_22 = arith.constant dense<0x7F800000> : vector<1x2xf32>
    %49 = vector.multi_reduction <minimumf>, %48, %cst_22 [2] : vector<1x2x128xf32> to vector<1x2xf32>
    %50 = vector.shape_cast %49 : vector<1x2xf32> to vector<1x2x1xf32>
    %cst_23 = arith.constant dense<0x7F800000> : vector<1x1xf32>
    %51 = vector.multi_reduction <minimumf>, %50, %cst_23 [1] : vector<1x2x1xf32> to vector<1x1xf32>
    %52 = vector.shape_cast %51 : vector<1x1xf32> to vector<1x1x1xf32>
    %53 = arith.subf %40, %52 : vector<1x1x1xf32>
    %54 = tpu.reciprocal %53 : vector<1x1x1xf32> -> vector<1x1x1xf32>
    %55 = vector.broadcast %52 : vector<1x1x1xf32> to vector<1x2x128xf32>
    %56 = arith.subf %46, %55 : vector<1x2x128xf32>
    %57 = arith.mulf %54, %13 : vector<1x1x1xf32>
    %58 = vector.broadcast %57 : vector<1x1x1xf32> to vector<1x2x128xf32>
    %59 = arith.mulf %56, %58 : vector<1x2x128xf32>
    %60 = vector.broadcast %12 : vector<1x1x1xf32> to vector<1x2x128xf32>
    %61 = arith.addf %59, %60 : vector<1x2x128xf32>
    %62 = arith.addf %0, %61 : vector<1x2x128xf32>
    %c0_24 = arith.constant 0 : index
    %c0_25 = arith.constant 0 : index
    %c0_26 = arith.constant 0 : index
    %63 = vector.load %arg6[%c0_24, %c0_25, %c0_26] : memref<1x2x128xf32, #tpu.memory_space<vmem>>, vector<1x2x128xf32>
    tpu.vector_store %arg6[%c0_24, %c0_25, %c0_26], %62 {strides = array<i32>} : memref<1x2x128xf32, #tpu.memory_space<vmem>>, vector<1x2x128xf32>,
    return
  }
  func.func @transform_0(%arg0: i32) -> (i32, i32, i32) {
    %c0_i32 = arith.constant 0 : i32
    %c0_i32_0 = arith.constant 0 : i32
    %c0_i32_1 = arith.constant 0 : i32
    return %arg0, %c0_i32, %c0_i32_0 : i32, i32, i32
  }
  func.func @transform_1(%arg0: i32) -> (i32, i32, i32) {
    %c0_i32 = arith.constant 0 : i32
    %c0_i32_0 = arith.constant 0 : i32
    %c0_i32_1 = arith.constant 0 : i32
    return %arg0, %c0_i32, %c0_i32_0 : i32, i32, i32
  }
  func.func @transform_2(%arg0: i32) -> (i32, i32, i32) {
    %c0_i32 = arith.constant 0 : i32
    %c0_i32_0 = arith.constant 0 : i32
    %c0_i32_1 = arith.constant 0 : i32
    %c0_i32_2 = arith.constant 0 : i32
    return %c0_i32, %c0_i32_0, %c0_i32_1 : i32, i32, i32
  }
  func.func @transform_3(%arg0: i32) -> (i32, i32, i32) {
    %c0_i32 = arith.constant 0 : i32
    %c0_i32_0 = arith.constant 0 : i32
    %c0_i32_1 = arith.constant 0 : i32
    %c0_i32_2 = arith.constant 0 : i32
    return %c0_i32, %c0_i32_0, %c0_i32_1 : i32, i32, i32
  }
  func.func @transform_4(%arg0: i32) -> (i32, i32, i32) {
    %c0_i32 = arith.constant 0 : i32
    %c0_i32_0 = arith.constant 0 : i32
    %c0_i32_1 = arith.constant 0 : i32
    %c0_i32_2 = arith.constant 0 : i32
    return %c0_i32, %c0_i32_0, %c0_i32_1 : i32, i32, i32
  }
  func.func @transform_5(%arg0: i32) -> (i32, i32, i32) {
    %c0_i32 = arith.constant 0 : i32
    %c0_i32_0 = arith.constant 0 : i32
    %c0_i32_1 = arith.constant 0 : i32
    return %arg0, %c0_i32, %c0_i32_0 : i32, i32, i32
  }
}

</mosaic_0001>

<llo_original>
// kernel: tpu_custom_call.1
$region0: #{tpu_custom_call.1}
  #allocation0 [shape = 'u32[]', space=smem, size = 0x4, offset = 0x4, fixed_abs, tag = 'smem constant byte address 0x4 - core index']
  #allocation1 [shape = 'u32[144,128]{1,0:T(1,128)}', space=vmem, size = 0x12000, scoped, tag = 'internal scratch']
  %s0 = inlined_call_operand.hbm [shape: f32[2,2,128], index: 0, kind: input, shape index: {}, may-alias: {0,5}]
  %s1 = inlined_call_operand.vmem [shape: f32[2,1,128], index: 1, kind: input, shape index: {}]
  %s2 = inlined_call_operand.vmem [shape: f32[1,2,128], index: 2, kind: input, shape index: {}]
  %s3 = inlined_call_operand.vmem [shape: f32[1,2,128], index: 3, kind: input, shape index: {}]
  %s4 = inlined_call_operand.vmem [shape: f32[1,2,128], index: 4, kind: input, shape index: {}]
  %s5 = inlined_call_operand.hbm [shape: f32[2,2,128], index: 5, kind: output, shape index: {}, may-alias: {0,5}]
  %s6 = sld [smem:[#allocation0]]
  $region57: #{tpu_custom_call.1} parent=0
    _
  %s8 = ssub.s32 1, %s6
  %s9 = scalar_select 0, %s8, %s6
  $region1: #{tpu_custom_call.1} parent=0
    #allocation2 [shape = 'u8[2048]{0}', space=vmem, size = 0x800, scoped, tag = 'input window, operand 0']
    #allocation3 [shape = 's32[2]{0}', space=sflag, size = 0x8, scoped, tag = 'scoped memory for tpu_custom_call.1']
    #allocation4 [shape = 's32[2]{0}', space=sflag, size = 0x8, scoped, tag = 'scoped memory for tpu_custom_call.1']
    #allocation5 [shape = 'u8[2048]{0}', space=vmem, size = 0x800, scoped, tag = 'output window, operand 0']
    %10 = vsyncpa [#allocation3], 0
    %s11 = scalar_lea.sflag [#allocation3], 1
    %12 = vsyncpa %s11, 0
    %13 = vsyncpa [#allocation4], 0
    %s14 = scalar_lea.sflag [#allocation4], 1
    %15 = vsyncpa %s14, 0
    loop: start=0, step=1, limit=4
    $region2: #{tpu_custom_call.1} parent=1 // loop_pre_header
      _
    $region3: #{tpu_custom_call.1} parent=1 // loop_header
      %s17 = sphi 0, %s21
      %p18 = scmp.ge.s32.totalorder %s17, 4
      %s27 = sphi 0, %s29
      %s30 = sphi 0, %s27
      %s31 = sphi 0, %s30
      %s47 = sphi 0, %s31
      %s53 = sphi 0, %s55
      %s56 = sphi 0, %s53
      %s57 = sphi 0, %s56
      %s73 = sphi 0, %s57
      %s77 = sphi 0, %s77
      %s79 = sphi 0, %s77
      %s80 = sphi 0, %s79
      %s94 = sphi 0, %s80
      %s98 = sphi 0, %s98
      %s100 = sphi 0, %s98
      %s101 = sphi 0, %s100
      %s115 = sphi 0, %s101
      %s119 = sphi 0, %s119
      %s121 = sphi 0, %s119
      %s122 = sphi 0, %s121
      %s136 = sphi 0, %s122
      %s142 = sphi 0, %s144
      %s145 = sphi 0, %s142
      %s146 = sphi 0, %s145
      %s162 = sphi 0, %s146
    $region4: #{tpu_custom_call.1} parent=1 // loop_header_branch
      %20 = sbr.rel (%p18) target = $region8
    $region5: #{tpu_custom_call.1} parent=1 // loop_body
      %s22 = ssub.s32 %s17, 1
      %s23 = ssub.s32 %s17, 2
      %s24 = sadd.s32 %s17, 1
      %s25 = ssub.s32 %s17, %s24
      %p26 = scmp.eq.s32.totalorder %s25, 0
      %s28 = sadd.s32 %s27, 1
      %s29 = scalar_select %p26, %s27, %s28
      %p32 = pneg %p26
      %p33 = scmp.eq.s32.totalorder %s17, 1
      %p34 = por %p32, %p33
      %p35 = scmp.ne.s32.totalorder %s27, %s30
      %p36 = scmp.eq.s32.totalorder %s17, 0
      %p37 = por %p35, %p36
      %p38 = scmp.ne.s32.totalorder %s27, %s30
      %p39 = scmp.eq.s32.totalorder %s22, 1
      %p40 = por %p38, %p39
      %p41 = scmp.ne.s32.totalorder %s30, %s31
      %p42 = scmp.eq.s32.totalorder %s22, 0
      %p43 = por %p41, %p42
      %p44 = scmp.ne.s32.totalorder %s30, %s31
      %p45 = scmp.eq.s32.totalorder %s23, 1
      %p46 = por %p44, %p45
      %p48 = scmp.ne.s32.totalorder %s31, %s47
      %p49 = scmp.eq.s32.totalorder %s23, 0
      %p50 = por %p48, %p49
      %s51 = ssub.s32 %s17, %s24
      %p52 = scmp.eq.s32.totalorder %s51, 0
      %s54 = sadd.s32 %s53, 1
      %s55 = scalar_select %p52, %s53, %s54
      %p58 = pneg %p52
      %p59 = scmp.eq.s32.totalorder %s17, 1
      %p60 = por %p58, %p59
      %p61 = scmp.ne.s32.totalorder %s53, %s56
      %p62 = scmp.eq.s32.totalorder %s17, 0
      %p63 = por %p61, %p62
      %p64 = scmp.ne.s32.totalorder %s53, %s56
      %p65 = scmp.eq.s32.totalorder %s22, 1
      %p66 = por %p64, %p65
      %p67 = scmp.ne.s32.totalorder %s56, %s57
      %p68 = scmp.eq.s32.totalorder %s22, 0
      %p69 = por %p67, %p68
      %p70 = scmp.ne.s32.totalorder %s56, %s57
      %p71 = scmp.eq.s32.totalorder %s23, 1
      %p72 = por %p70, %p71
      %p74 = scmp.ne.s32.totalorder %s57, %s73
      %p75 = scmp.eq.s32.totalorder %s23, 0
      %p76 = por %p74, %p75
      %s78 = sadd.s32 %s77, 1
      %p81 = scmp.eq.s32.totalorder %s17, 1
      %p82 = scmp.ne.s32.totalorder %s77, %s79
      %p83 = scmp.eq.s32.totalorder %s17, 0
      %p84 = por %p82, %p83
      %p85 = scmp.ne.s32.totalorder %s77, %s79
      %p86 = scmp.eq.s32.totalorder %s22, 1
      %p87 = por %p85, %p86
      %p88 = scmp.ne.s32.totalorder %s79, %s80
      %p89 = scmp.eq.s32.totalorder %s22, 0
      %p90 = por %p88, %p89
      %p91 = scmp.ne.s32.totalorder %s79, %s80
      %p92 = scmp.eq.s32.totalorder %s23, 1
      %p93 = por %p91, %p92
      %p95 = scmp.ne.s32.totalorder %s80, %s94
      %p96 = scmp.eq.s32.totalorder %s23, 0
      %p97 = por %p95, %p96
      %s99 = sadd.s32 %s98, 1
      %p102 = scmp.eq.s32.totalorder %s17, 1
      %p103 = scmp.ne.s32.totalorder %s98, %s100
      %p104 = scmp.eq.s32.totalorder %s17, 0
      %p105 = por %p103, %p104
      %p106 = scmp.ne.s32.totalorder %s98, %s100
      %p107 = scmp.eq.s32.totalorder %s22, 1
      %p108 = por %p106, %p107
      %p109 = scmp.ne.s32.totalorder %s100, %s101
      %p110 = scmp.eq.s32.totalorder %s22, 0
      %p111 = por %p109, %p110
      %p112 = scmp.ne.s32.totalorder %s100, %s101
      %p113 = scmp.eq.s32.totalorder %s23, 1
      %p114 = por %p112, %p113
      %p116 = scmp.ne.s32.totalorder %s101, %s115
      %p117 = scmp.eq.s32.totalorder %s23, 0
      %p118 = por %p116, %p117
      %s120 = sadd.s32 %s119, 1
      %p123 = scmp.eq.s32.totalorder %s17, 1
      %p124 = scmp.ne.s32.totalorder %s119, %s121
      %p125 = scmp.eq.s32.totalorder %s17, 0
      %p126 = por %p124, %p125
      %p127 = scmp.ne.s32.totalorder %s119, %s121
      %p128 = scmp.eq.s32.totalorder %s22, 1
      %p129 = por %p127, %p128
      %p130 = scmp.ne.s32.totalorder %s121, %s122
      %p131 = scmp.eq.s32.totalorder %s22, 0
      %p132 = por %p130, %p131
      %p133 = scmp.ne.s32.totalorder %s121, %s122
      %p134 = scmp.eq.s32.totalorder %s23, 1
      %p135 = por %p133, %p134
      %p137 = scmp.ne.s32.totalorder %s122, %s136
      %p138 = scmp.eq.s32.totalorder %s23, 0
      %p139 = por %p137, %p138
      %s140 = ssub.s32 %s17, %s24
      %p141 = scmp.eq.s32.totalorder %s140, 0
      %s143 = sadd.s32 %s142, 1
      %s144 = scalar_select %p141, %s142, %s143
      %p147 = pneg %p141
      %p148 = scmp.eq.s32.totalorder %s17, 1
      %p149 = por %p147, %p148
      %p150 = scmp.ne.s32.totalorder %s142, %s145
      %p151 = scmp.eq.s32.totalorder %s17, 0
      %p152 = por %p150, %p151
      %p153 = scmp.ne.s32.totalorder %s142, %s145
      %p154 = scmp.eq.s32.totalorder %s22, 1
      %p155 = por %p153, %p154
      %p156 = scmp.ne.s32.totalorder %s145, %s146
      %p157 = scmp.eq.s32.totalorder %s22, 0
      %p158 = por %p156, %p157
      %p159 = scmp.ne.s32.totalorder %s145, %s146
      %p160 = scmp.eq.s32.totalorder %s23, 1
      %p161 = por %p159, %p160
      %p163 = scmp.ne.s32.totalorder %s146, %s162
      %p164 = scmp.eq.s32.totalorder %s23, 0
      %p165 = por %p163, %p164
      %p166 = scmp.le.s32.totalorder 1, %s17
      %p167 = scmp.lt.s32.totalorder %s17, 3
      %p168 = pnand %p166, %p167
      %p169 = pneg %p168
      // Predicated region
      $region9: #{tpu_custom_call.1} parent=5 // pred_check
        _
      $region10: #{tpu_custom_call.1} parent=5 // pred_check_branch
        %171 = sbr.rel (%p168) target = $region12
      $region11: #{tpu_custom_call.1} parent=5 // pred_region
        %s172 = ssub.s32 %s17, 1
        // Predicated region
        $region13: #{tpu_custom_call.1} parent=11 // pred_check
          %p173 = pneg %p90
        $region14: #{tpu_custom_call.1} parent=11 // pred_check_branch
          %175 = sbr.rel (%p173) target = $region16
        $region15: #{tpu_custom_call.1} parent=11 // pred_region
          _
        $region16: #{tpu_custom_call.1} parent=11 // pred_fallthru
          _
        // Predicated region
        $region17: #{tpu_custom_call.1} parent=11 // pred_check
          %p176 = pneg %p111
        $region18: #{tpu_custom_call.1} parent=11 // pred_check_branch
          %178 = sbr.rel (%p176) target = $region20
        $region19: #{tpu_custom_call.1} parent=11 // pred_region
          _
        $region20: #{tpu_custom_call.1} parent=11 // pred_fallthru
          _
        // Predicated region
        $region21: #{tpu_custom_call.1} parent=11 // pred_check
          %p179 = pneg %p132
        $region22: #{tpu_custom_call.1} parent=11 // pred_check_branch
          %181 = sbr.rel (%p179) target = $region24
        $region23: #{tpu_custom_call.1} parent=11 // pred_region
          _
        $region24: #{tpu_custom_call.1} parent=11 // pred_fallthru
          _
      $region12: #{tpu_custom_call.1} parent=5 // pred_fallthru
        _
      %p182 = scmp.lt.s32.totalorder %s17, 2
      // Predicated region
      $region25: #{tpu_custom_call.1} parent=5 // pred_check
        %p183 = pneg %p182
      $region26: #{tpu_custom_call.1} parent=5 // pred_check_branch
        %185 = sbr.rel (%p183) target = $region28
      $region27: #{tpu_custom_call.1} parent=5 // pred_region
        // Predicated region
        $region29: #{tpu_custom_call.1} parent=27 // pred_check
          %p186 = pneg %p37
        $region30: #{tpu_custom_call.1} parent=27 // pred_check_branch
          %188 = sbr.rel (%p186) target = $region32
        $region31: #{tpu_custom_call.1} parent=27 // pred_region
          %s189 = sand.u32 %s27, 1
          %s190 = scalar_lea.sflag [#allocation3], %s189
          %s191 = sand.u32 %s27, 1
          %s192 = smul.addr %s191, 2
          %s193 = scalar_lea.vmem [#allocation2], %s192
          %s195 = ssub.s32 32, 32
          %196 = vsyncadd %s190, %s195
          %s197 = smul.addr %s17, 32
          %s198 = scalar_lea.hbm %s0, %s197
          %s200 = sshll.u32 %s193, 4
          %s201 = int_to_ptr.vmem [resolvable:$true] %s200
          %203 = dma.hbm_to_vmem [thread:$0]  %s198, 32, %s201, %s190
        $region32: #{tpu_custom_call.1} parent=27 // pred_fallthru
          _
        // Predicated region
        $region33: #{tpu_custom_call.1} parent=27 // pred_check
          %p204 = pneg %p63
        $region34: #{tpu_custom_call.1} parent=27 // pred_check_branch
          %206 = sbr.rel (%p204) target = $region36
        $region35: #{tpu_custom_call.1} parent=27 // pred_region
          %p207 = scmp.lt.s32.totalorder %s17, 1
          %s208 = scalar_select %p207, %s17, 1
          %s209 = scalar_lea.vmem %s1, %s208
        $region36: #{tpu_custom_call.1} parent=27 // pred_fallthru
          _
      $region28: #{tpu_custom_call.1} parent=5 // pred_fallthru
        _
      %p210 = scmp.le.s32.totalorder 1, %s17
      %p211 = scmp.lt.s32.totalorder %s17, 3
      %p212 = pnand %p210, %p211
      %p213 = pneg %p212
      // Predicated region
      $region37: #{tpu_custom_call.1} parent=5 // pred_check
        _
      $region38: #{tpu_custom_call.1} parent=5 // pred_check_branch
        %215 = sbr.rel (%p212) target = $region40
      $region39: #{tpu_custom_call.1} parent=5 // pred_region
        %s216 = ssub.s32 %s17, 1
        %s217 = sand.u32 %s30, 1
        %s218 = scalar_lea.sflag [#allocation3], %s217
        %s219 = sand.u32 %s30, 1
        %s220 = smul.addr %s219, 2
        %s221 = scalar_lea.vmem [#allocation2], %s220
        // Predicated region
        $region41: #{tpu_custom_call.1} parent=39 // pred_check
          %p222 = pneg %p43
        $region42: #{tpu_custom_call.1} parent=39 // pred_check_branch
          %224 = sbr.rel (%p222) target = $region44
        $region43: #{tpu_custom_call.1} parent=39 // pred_region
          %225 = dma.done %s218, 32
        $region44: #{tpu_custom_call.1} parent=39 // pred_fallthru
          _
        %s226 = sand.u32 %s30, 1
        %s227 = scalar_lea.sflag [#allocation3], %s226
        %s228 = sand.u32 %s30, 1
        %s229 = smul.addr %s228, 2
        %s230 = scalar_lea.vmem [#allocation2], %s229
        %p231 = pneg %p43
        %p232 = pneg %p40
        %p233 = scmp.lt.s32.totalorder %s22, 1
        %s234 = scalar_select %p233, %s22, 1
        %s235 = scalar_lea.vmem %s1, %s234
        %p236 = pneg %p69
        %p237 = pneg %p66
        %p238 = pneg %p90
        %p239 = pneg %p87
        %p240 = pneg %p111
        %p241 = pneg %p108
        %p242 = pneg %p132
        %p243 = pneg %p129
        %p244 = pneg %p158
        %p245 = pneg %p155
        %s246 = sand.u32 %s145, 1
        %s247 = scalar_lea.sflag [#allocation4], %s246
        %s248 = sand.u32 %s145, 1
        %s249 = smul.addr %s248, 2
        %s250 = scalar_lea.vmem [#allocation5], %s249
        %p251 = scmp.lt.s32.totalorder %s22, 1
        %s252 = scalar_select %p251, %s22, 1
        %s253 = scalar_lea.vmem %s1, %s252
        %v254 = vld [vmem:[%s221] sm:$0x3]
        %v255 = vld [vmem:[%s253] sm:$0x1]
        %v256 = vld [vmem:[%s2] sm:$0x3]
        %v257 = vld [vmem:[%s3] sm:$0x3]
        %v258 = vld [vmem:[%s4] sm:$0x3]
        %vm259 = vcmp.ne.f32.partialorder %v258, 0.0
        %v261 = vlaneseq
        %v262 = vshrl.u32 %v261, 7
        %v263 = vsub.s32 0, %v262
        %v264 = vrot.slane %v255, %v263
        %265 = vset.pattern.permute.xlu0 3
        %266 = vperm.xlu0 %265, %v264
        %v267 = vpop.permute.xlu0 %266
        %v269 = vsub.f32 %v256, %v267
        %270 = vset.pattern.permute.xlu0 4
        %271 = vperm.xlu0 %270, %v264
        %v272 = vpop.permute.xlu0 %271
        %v274 = vsub.f32 %v257, %v272
        %v275 = vmul.f32 %v269, %v269
        %276 = vset.pattern.permute.xlu0 0
        %277 = vperm.xlu0 %276, %v264
        %v278 = vpop.permute.xlu0 %277
        %v280 = vmul.f32 %v278, %v275
        %v281 = vmul.f32 %v255, 2.0
        %v282 = vmul.f32 %v269, %v274
        %v284 = vlaneseq
        %v285 = vshrl.u32 %v284, 7
        %v286 = vsub.s32 0, %v285
        %v287 = vrot.slane %v281, %v286
        %288 = vset.pattern.permute.xlu0 1
        %289 = vperm.xlu0 %288, %v287
        %v290 = vpop.permute.xlu0 %289
        %v292 = vmul.f32 %v290, %v282
        %v293 = vadd.f32 %v280, %v292
        %v294 = vmul.f32 %v274, %v274
        %295 = vset.pattern.permute.xlu0 2
        %296 = vperm.xlu0 %295, %v264
        %v297 = vpop.permute.xlu0 %296
        %v299 = vmul.f32 %v297, %v294
        %v300 = vadd.f32 %v293, %v299
        %v301 = vmul.f32 %v300, %v300
        %v302 = vsub.f32 0.0, %v301
        %v303 = vmul.f32 %v302, 1.442695
        %v304 = vpow.pop %v303
        %v305 = vsel %vm259, %v304, -inf
        %vm306 = vcmask 1041408
        %v307 = vsel %vm306, %v305, -inf
        %308 = vmax.xlane.f32.xlu0 %v307
        %v309 = vpop.xlane.xlu0 %308
        %v310 = vsel %vm306, %v309, -inf
        %v311 = vrot.slane %v310, 4
        %v312 = vmax.f32 %v310, %v311
        %v313 = vrot.slane %v312, 2
        %v314 = vmax.f32 %v312, %v313
        %v315 = vrot.slane %v314, 1
        %v316 = vmax.f32 %v314, %v315
        %v317 = vmul.f32 %v316, 1e-06
        %vm318 = vcmp.lt.f32.partialorder %v304, %v317
        %v319 = vsel %vm318, 0.0, %v304
        %v320 = vsel %vm259, %v319, inf
        %v321 = vsel %vm306, %v320, inf
        %322 = vmin.xlane.f32.xlu0 %v321
        %v323 = vpop.xlane.xlu0 %322
        %v324 = vsel %vm306, %v323, inf
        %v325 = vrot.slane %v324, 4
        %v326 = vmin.f32 %v324, %v325
        %v327 = vrot.slane %v326, 2
        %v328 = vmin.f32 %v326, %v327
        %v329 = vrot.slane %v328, 1
        %v330 = vmin.f32 %v328, %v329
        %v331 = vsub.f32 %v316, %v330
        %v332 = vrcp.pop %v331
        %v333 = vsub.f32 %v319, %v330
        %v334 = vmul.f32 %v332, %v255
        %v336 = vlaneseq
        %v337 = vshrl.u32 %v336, 7
        %v338 = vsub.s32 0, %v337
        %v339 = vrot.slane %v334, %v338
        %340 = vset.pattern.permute.xlu0 6
        %341 = vperm.xlu0 %340, %v339
        %v342 = vpop.permute.xlu0 %341
        %v344 = vmul.f32 %v333, %v342
        %345 = vset.pattern.permute.xlu0 5
        %346 = vperm.xlu0 %345, %v264
        %v347 = vpop.permute.xlu0 %346
        %v349 = vadd.f32 %v344, %v347
        %v350 = vadd.f32 %v254, %v349
        %351 = vst [vmem:[%s250] sm:$0x3] %v350
        %s352 = sand.u32 %s145, 1
        %s353 = scalar_lea.sflag [#allocation4], %s352
        %s354 = sand.u32 %s145, 1
        %s355 = smul.addr %s354, 2
        %s356 = scalar_lea.vmem [#allocation5], %s355
        // Predicated region
        $region45: #{tpu_custom_call.1} parent=39 // pred_check
          %p357 = pneg %p155
        $region46: #{tpu_custom_call.1} parent=39 // pred_check_branch
          %359 = sbr.rel (%p357) target = $region48
        $region47: #{tpu_custom_call.1} parent=39 // pred_region
          %s361 = ssub.s32 32, 32
          %362 = vsyncadd %s353, %s361
          %s363 = smul.addr %s22, 32
          %s364 = scalar_lea.hbm %s5, %s363
          %s366 = sshll.u32 %s356, 4
          %s367 = int_to_ptr.vmem [resolvable:$true] %s366
          %369 = dma.vmem_to_hbm [thread:$0]  %s367, 32, %s364, %s353
        $region48: #{tpu_custom_call.1} parent=39 // pred_fallthru
          _
      $region40: #{tpu_custom_call.1} parent=5 // pred_fallthru
        _
      %p370 = scmp.le.s32.totalorder 2, %s17
      // Predicated region
      $region49: #{tpu_custom_call.1} parent=5 // pred_check
        %p371 = pneg %p370
      $region50: #{tpu_custom_call.1} parent=5 // pred_check_branch
        %373 = sbr.rel (%p371) target = $region52
      $region51: #{tpu_custom_call.1} parent=5 // pred_region
        %s374 = ssub.s32 %s17, 2
        // Predicated region
        $region53: #{tpu_custom_call.1} parent=51 // pred_check
          %p375 = pneg %p161
        $region54: #{tpu_custom_call.1} parent=51 // pred_check_branch
          %377 = sbr.rel (%p375) target = $region56
        $region55: #{tpu_custom_call.1} parent=51 // pred_region
          %s378 = sand.u32 %s146, 1
          %s379 = scalar_lea.sflag [#allocation4], %s378
          %s380 = sand.u32 %s146, 1
          %s381 = smul.addr %s380, 2
          %s382 = scalar_lea.vmem [#allocation5], %s381
          %383 = dma.done %s379, 32
        $region56: #{tpu_custom_call.1} parent=51 // pred_fallthru
          _
      $region52: #{tpu_custom_call.1} parent=5 // pred_fallthru
        _
    $region6: #{tpu_custom_call.1} parent=1 // loop_footer
      %s21 = sadd.s32 1, %s17
    $region7: #{tpu_custom_call.1} parent=1 // loop_footer_branch
      %16 = sbr.rel target = $region3
    $region8: #{tpu_custom_call.1} parent=1 // loop_exit
      _
    %384 = vsyncpa [#allocation3], 1
    %s385 = scalar_lea.sflag [#allocation3], 1
    %386 = vsyncpa %s385, 1
    %387 = vsyncpa [#allocation4], 1
    %s388 = scalar_lea.sflag [#allocation4], 1
    %389 = vsyncpa %s388, 1

</llo_original>
